<compile_context>
chip_gen: v6e
topology: v6e:2x2x1
jax: 0.10.0
libtpu: 0.0.40
codegen_flags: <defaults>
</compile_context>

<pallas_src>
import functools

import jax
import jax.numpy as jnp
from jax.experimental import pallas as pl
from jax.experimental.pallas import tpu as pltpu


def _ceil_to(a, m):
    return -(-a // m) * m


def _discriminator_kernel(training, *refs):
    """Fused lin1 -> relu -> [dropout] -> lin2 -> relu -> [dropout] -> lin3.

    All activations live in the transposed (features, batch) layout so the
    batch dimension occupies the 128-lane axis.
    """
    if training:
        (x_ref, w1_ref, b1_ref, w2_ref, b2_ref, w3_ref, b3_ref,
         m1_ref, m2_ref, o_ref) = refs
    else:
        (x_ref, w1_ref, b1_ref, w2_ref, b2_ref, w3_ref, b3_ref, o_ref) = refs
        m1_ref = m2_ref = None

    dt = x_ref.dtype  # compute dtype for MXU operands (f32 or bf16)

    # layer 1: (h1, f_in) @ (f_in, tn) -> (h1, tn), f32 accumulation
    h = jnp.dot(w1_ref[...], x_ref[...], preferred_element_type=jnp.float32)
    h = jnp.maximum(h + b1_ref[...], 0.0)
    if training:
        h = h * m1_ref[...].astype(jnp.float32)  # mask pre-scaled by 2.0

    # layer 2: (h2, h1) @ (h1, tn) -> (h2, tn)
    h = jnp.dot(w2_ref[...], h.astype(dt), preferred_element_type=jnp.float32)
    h = jnp.maximum(h + b2_ref[...], 0.0)
    if training:
        h = h * m2_ref[...].astype(jnp.float32)

    # layer 3: (f_out, h2) @ (h2, tn) -> (f_out, tn)
    out = jnp.dot(w3_ref[...], h.astype(dt), preferred_element_type=jnp.float32)
    o_ref[...] = (out + b3_ref[...]).astype(o_ref.dtype)


def discriminator_forward(x, params, *, training=False, dropout_masks=None):
    """Forward pass.

    x: (N, in_channels)
    params: (w1, b1, w2, b2, w3, b3); weights (fan_in, fan_out), biases (fan_out,)
    dropout_masks: required when training=True -- boolean keep-masks of shapes
      (N, hidden1) and (N, hidden2) (keep-prob 0.5), e.g. from jax.random.bernoulli.
    Returns (N, out_channels).
    """
    w1, b1, w2, b2, w3, b3 = params
    N, f_in = x.shape
    h1 = w1.shape[1]
    h2 = w2.shape[1]
    f_out = w3.shape[1]
    dt = x.dtype

    LANE = 128
    n_pad = _ceil_to(N, LANE)
    if n_pad <= 1024:
        tn = n_pad                      # single grid step for small/medium N
    else:
        tn = 512                        # large N: 512-wide lane tiles
        n_pad = _ceil_to(N, tn)

    # Transposed, lane-dense layout: batch on the 128-lane axis.
    xT = x.T
    if n_pad != N:
        xT = jnp.zeros((f_in, n_pad), dt).at[:, :N].set(xT)
    xT = xT.astype(dt)

    w1t = w1.T.astype(dt)
    w2t = w2.T.astype(dt)
    w3t = w3.T.astype(dt)
    b1c = b1.reshape(h1, 1).astype(jnp.float32)
    b2c = b2.reshape(h2, 1).astype(jnp.float32)
    b3c = b3.reshape(f_out, 1).astype(jnp.float32)

    inputs = [xT, w1t, b1c, w2t, b2c, w3t, b3c]
    in_specs = [
        pl.BlockSpec((f_in, tn), lambda j: (0, j)),    # x^T column tile
        pl.BlockSpec((h1, f_in), lambda j: (0, 0)),    # W1^T (resident)
        pl.BlockSpec((h1, 1), lambda j: (0, 0)),       # b1
        pl.BlockSpec((h2, h1), lambda j: (0, 0)),      # W2^T (resident)
        pl.BlockSpec((h2, 1), lambda j: (0, 0)),       # b2
        pl.BlockSpec((f_out, h2), lambda j: (0, 0)),   # W3^T (resident)
        pl.BlockSpec((f_out, 1), lambda j: (0, 0)),    # b3
    ]

    if training:
        assert dropout_masks is not None, "training=True requires dropout_masks"
        m1, m2 = dropout_masks
        # Pre-scale by 1/(1-p) = 2 and move to the transposed layout.
        m1s = m1.T.astype(dt) * jnp.asarray(2.0, dt)
        m2s = m2.T.astype(dt) * jnp.asarray(2.0, dt)
        if n_pad != N:
            m1s = jnp.zeros((h1, n_pad), dt).at[:, :N].set(m1s)
            m2s = jnp.zeros((h2, n_pad), dt).at[:, :N].set(m2s)
        inputs += [m1s, m2s]
        in_specs += [
            pl.BlockSpec((h1, tn), lambda j: (0, j)),
            pl.BlockSpec((h2, tn), lambda j: (0, j)),
        ]

    flops = 2 * n_pad * (f_in * h1 + h1 * h2 + h2 * f_out)
    bytes_accessed = int(
        sum(int(a.size) * a.dtype.itemsize for a in inputs)
        + n_pad * f_out * jnp.dtype(dt).itemsize
    )

    outT = pl.pallas_call(
        functools.partial(_discriminator_kernel, training),
        out_shape=jax.ShapeDtypeStruct((f_out, n_pad), dt),
        grid=(n_pad // tn,),
        in_specs=in_specs,
        out_specs=pl.BlockSpec((f_out, tn), lambda j: (0, j)),
        compiler_params=pltpu.CompilerParams(
            dimension_semantics=("parallel",)),   # column tiles are independent
        cost_estimate=pl.CostEstimate(
            flops=flops, transcendentals=0, bytes_accessed=bytes_accessed),
    )(*inputs)

    return outT[:, :N].T


def init_discriminator_params(key, in_channels, hidden_channels1,
                              hidden_channels2, out_channels):
    """torch.nn.Linear-style init: uniform(-1/sqrt(fan_in), +1/sqrt(fan_in))."""
    def linear(k, fan_in, fan_out):
        kw, kb = jax.random.split(k)
        bound = 1.0 / (fan_in ** 0.5)
        w = jax.random.uniform(kw, (fan_in, fan_out), jnp.float32, -bound, bound)
        b = jax.random.uniform(kb, (fan_out,), jnp.float32, -bound, bound)
        return w, b

    k1, k2, k3 = jax.random.split(key, 3)
    w1, b1 = linear(k1, in_channels, hidden_channels1)
    w2, b2 = linear(k2, hidden_channels1, hidden_channels2)
    w3, b3 = linear(k3, hidden_channels2, out_channels)
    return (w1, b1, w2, b2, w3, b3)


def _reference(x, params, training=False, dropout_masks=None):
    """Pure-JAX reference with the same keep-masks."""
    w1, b1, w2, b2, w3, b3 = params
    h = jax.nn.relu(x @ w1 + b1)
    if training:
        h = h * dropout_masks[0].astype(h.dtype) * 2.0
    h = jax.nn.relu(h @ w2 + b2)
    if training:
        h = h * dropout_masks[1].astype(h.dtype) * 2.0
    return h @ w3 + b3


if __name__ == "__main__":
    # Shapes consistent with the module's forward:
    # x: (num_nodes, in_channels) = (128, 32); hidden 64 -> 32 -> out 16.
    N, IN_C, H1, H2, OUT_C = 128, 32, 64, 32, 16

    key = jax.random.PRNGKey(0)
    kx, kp, km1, km2 = jax.random.split(key, 4)
    x = jax.random.normal(kx, (N, IN_C), dtype=jnp.float32)
    params = init_discriminator_params(kp, IN_C, H1, H2, OUT_C)

    # ---- eval mode (dropout = identity) ----
    out = jax.block_until_ready(discriminator_forward(x, params, training=False))
    ref = _reference(x, params)
    assert out.shape == (N, OUT_C)
    # tolerance covers MXU default-precision differences on real TPUs
    assert jnp.allclose(out, ref, atol=1e-2, rtol=1e-2), "eval mismatch vs reference"

    # ---- training mode (dropout p=0.5 with host-supplied keep-masks) ----
    m1 = jax.random.bernoulli(km1, 0.5, (N, H1))
    m2 = jax.random.bernoulli(km2, 0.5, (N, H2))
    out_tr = jax.block_until_ready(
        discriminator_forward(x, params, training=True, dropout_masks=(m1, m2)))
    ref_tr = _reference(x, params, training=True, dropout_masks=(m1, m2))
    assert out_tr.shape == (N, OUT_C)
    assert jnp.allclose(out_tr, ref_tr, atol=1e-2, rtol=1e-2), "train mismatch vs reference"

    # ---- bf16 fast path (v5e/v6e/v7x MXU-native operands, f32 accumulation) ----
    x16 = x.astype(jnp.bfloat16)
    params16 = tuple(p.astype(jnp.bfloat16) for p in params)
    out16 = jax.block_until_ready(discriminator_forward(x16, params16, training=False))
    assert out16.shape == (N, OUT_C)
    out16_f32 = out16.astype(jnp.float32)
    assert bool(jnp.isfinite(out16_f32).all())
    assert jnp.allclose(out16_f32, ref, atol=0.25, rtol=0.05), "bf16 path too far off"

    print("KERNEL_OK")
</pallas_src>

<mosaic_0001>
module attributes {stable_mosaic.version = 11 : i64} {
  func.func @_discriminator_kernel(%arg0: i32, %arg1: memref<32x128xf32, #tpu.memory_space<vmem>>, %arg2: memref<64x32xf32, #tpu.memory_space<vmem>>, %arg3: memref<64x1xf32, #tpu.memory_space<vmem>>, %arg4: memref<32x64xf32, #tpu.memory_space<vmem>>, %arg5: memref<32x1xf32, #tpu.memory_space<vmem>>, %arg6: memref<16x32xf32, #tpu.memory_space<vmem>>, %arg7: memref<16x1xf32, #tpu.memory_space<vmem>>, %arg8: memref<16x128xf32, #tpu.memory_space<vmem>>) attributes {dimension_semantics = [#tpu.dimension_semantics<parallel>], iteration_bounds = array<i64: 1>, scalar_prefetch = 0 : i64, scratch_operands = 0 : i64, tpu.core_type = #tpu.core_type<tc>, window_params = [{transform_indices = @transform_0, window_bounds = array<i64: 32, 128>}, {pipeline_mode = #tpu.pipeline_mode<synchronous>, transform_indices = @transform_1, window_bounds = array<i64: 64, 32>}, {pipeline_mode = #tpu.pipeline_mode<synchronous>, transform_indices = @transform_2, window_bounds = array<i64: 64, 1>}, {pipeline_mode = #tpu.pipeline_mode<synchronous>, transform_indices = @transform_3, window_bounds = array<i64: 32, 64>}, {pipeline_mode = #tpu.pipeline_mode<synchronous>, transform_indices = @transform_4, window_bounds = array<i64: 32, 1>}, {pipeline_mode = #tpu.pipeline_mode<synchronous>, transform_indices = @transform_5, window_bounds = array<i64: 16, 32>}, {pipeline_mode = #tpu.pipeline_mode<synchronous>, transform_indices = @transform_6, window_bounds = array<i64: 16, 1>}, {transform_indices = @transform_7, window_bounds = array<i64: 16, 128>}]} {
    %c0 = arith.constant 0 : index
    %c0_0 = arith.constant 0 : index
    %0 = vector.load %arg2[%c0, %c0_0] : memref<64x32xf32, #tpu.memory_space<vmem>>, vector<64x32xf32>
    %c0_1 = arith.constant 0 : index
    %c0_2 = arith.constant 0 : index
    %1 = vector.load %arg1[%c0_1, %c0_2] : memref<32x128xf32, #tpu.memory_space<vmem>>, vector<32x128xf32>
    %cst = arith.constant dense<0.000000e+00> : vector<64x128xf32>
    %2 = tpu.matmul %0, %1, %cst {dimension_numbers = #tpu.dot_dimension_numbers<[1], [0], [0], [1], [0, 0, 1, 1], [], []>} : vector<64x32xf32>, vector<32x128xf32>, vector<64x128xf32> -> vector<64x128xf32>
    %c0_3 = arith.constant 0 : index
    %c0_4 = arith.constant 0 : index
    %3 = vector.load %arg3[%c0_3, %c0_4] : memref<64x1xf32, #tpu.memory_space<vmem>>, vector<64x1xf32>
    %4 = vector.broadcast %3 : vector<64x1xf32> to vector<64x128xf32>
    %5 = arith.addf %2, %4 : vector<64x128xf32>
    %cst_5 = arith.constant 0.000000e+00 : f32
    %6 = vector.broadcast %cst_5 : f32 to vector<64x128xf32>
    %7 = arith.maximumf %5, %6 : vector<64x128xf32>
    %c0_6 = arith.constant 0 : index
    %c0_7 = arith.constant 0 : index
    %8 = vector.load %arg4[%c0_6, %c0_7] : memref<32x64xf32, #tpu.memory_space<vmem>>, vector<32x64xf32>
    %cst_8 = arith.constant dense<0.000000e+00> : vector<32x128xf32>
    %9 = tpu.matmul %8, %7, %cst_8 {dimension_numbers = #tpu.dot_dimension_numbers<[1], [0], [0], [1], [0, 0, 1, 1], [], []>} : vector<32x64xf32>, vector<64x128xf32>, vector<32x128xf32> -> vector<32x128xf32>
    %c0_9 = arith.constant 0 : index
    %c0_10 = arith.constant 0 : index
    %10 = vector.load %arg5[%c0_9, %c0_10] : memref<32x1xf32, #tpu.memory_space<vmem>>, vector<32x1xf32>
    %11 = vector.broadcast %10 : vector<32x1xf32> to vector<32x128xf32>
    %12 = arith.addf %9, %11 : vector<32x128xf32>
    %cst_11 = arith.constant 0.000000e+00 : f32
    %13 = vector.broadcast %cst_11 : f32 to vector<32x128xf32>
    %14 = arith.maximumf %12, %13 : vector<32x128xf32>
    %c0_12 = arith.constant 0 : index
    %c0_13 = arith.constant 0 : index
    %15 = vector.load %arg6[%c0_12, %c0_13] : memref<16x32xf32, #tpu.memory_space<vmem>>, vector<16x32xf32>
    %cst_14 = arith.constant dense<0.000000e+00> : vector<16x128xf32>
    %16 = tpu.matmul %15, %14, %cst_14 {dimension_numbers = #tpu.dot_dimension_numbers<[1], [0], [0], [1], [0, 0, 1, 1], [], []>} : vector<16x32xf32>, vector<32x128xf32>, vector<16x128xf32> -> vector<16x128xf32>
    %c0_15 = arith.constant 0 : index
    %c0_16 = arith.constant 0 : index
    %17 = vector.load %arg7[%c0_15, %c0_16] : memref<16x1xf32, #tpu.memory_space<vmem>>, vector<16x1xf32>
    %18 = vector.broadcast %17 : vector<16x1xf32> to vector<16x128xf32>
    %19 = arith.addf %16, %18 : vector<16x128xf32>
    %c0_17 = arith.constant 0 : index
    %c0_18 = arith.constant 0 : index
    %20 = vector.load %arg8[%c0_17, %c0_18] : memref<16x128xf32, #tpu.memory_space<vmem>>, vector<16x128xf32>
    tpu.vector_store %arg8[%c0_17, %c0_18], %19 {strides = array<i32>} : memref<16x128xf32, #tpu.memory_space<vmem>>, vector<16x128xf32>,
    return
  }
  func.func @transform_0(%arg0: i32) -> (i32, i32) {
    %c0_i32 = arith.constant 0 : i32
    %c0_i32_0 = arith.constant 0 : i32
    return %c0_i32, %arg0 : i32, i32
  }
  func.func @transform_1(%arg0: i32) -> (i32, i32) {
    %c0_i32 = arith.constant 0 : i32
    %c0_i32_0 = arith.constant 0 : i32
    %c0_i32_1 = arith.constant 0 : i32
    return %c0_i32, %c0_i32_0 : i32, i32
  }
  func.func @transform_2(%arg0: i32) -> (i32, i32) {
    %c0_i32 = arith.constant 0 : i32
    %c0_i32_0 = arith.constant 0 : i32
    %c0_i32_1 = arith.constant 0 : i32
    return %c0_i32, %c0_i32_0 : i32, i32
  }
  func.func @transform_3(%arg0: i32) -> (i32, i32) {
    %c0_i32 = arith.constant 0 : i32
    %c0_i32_0 = arith.constant 0 : i32
    %c0_i32_1 = arith.constant 0 : i32
    return %c0_i32, %c0_i32_0 : i32, i32
  }
  func.func @transform_4(%arg0: i32) -> (i32, i32) {
    %c0_i32 = arith.constant 0 : i32
    %c0_i32_0 = arith.constant 0 : i32
    %c0_i32_1 = arith.constant 0 : i32
    return %c0_i32, %c0_i32_0 : i32, i32
  }
  func.func @transform_5(%arg0: i32) -> (i32, i32) {
    %c0_i32 = arith.constant 0 : i32
    %c0_i32_0 = arith.constant 0 : i32
    %c0_i32_1 = arith.constant 0 : i32
    return %c0_i32, %c0_i32_0 : i32, i32
  }
  func.func @transform_6(%arg0: i32) -> (i32, i32) {
    %c0_i32 = arith.constant 0 : i32
    %c0_i32_0 = arith.constant 0 : i32
    %c0_i32_1 = arith.constant 0 : i32
    return %c0_i32, %c0_i32_0 : i32, i32
  }
  func.func @transform_7(%arg0: i32) -> (i32, i32) {
    %c0_i32 = arith.constant 0 : i32
    %c0_i32_0 = arith.constant 0 : i32
    return %c0_i32, %arg0 : i32, i32
  }
}

</mosaic_0001>

<llo_original>
// kernel: tpu_custom_call.1
$region0: #{tpu_custom_call.1}
  #allocation0 [shape = 'u32[]', space=smem, size = 0x4, offset = 0x4, fixed_abs, tag = 'smem constant byte address 0x4 - core index']
  #allocation1 [shape = 'u32[144,128]{1,0:T(1,128)}', space=vmem, size = 0x12000, scoped, tag = 'internal scratch']
  %s0 = inlined_call_operand.vmem [shape: f32[32,128], index: 0, kind: input, shape index: {}]
  %s1 = inlined_call_operand.vmem [shape: f32[64,32], index: 1, kind: input, shape index: {}]
  %s2 = inlined_call_operand.vmem [shape: f32[64,1], index: 2, kind: input, shape index: {}]
  %s3 = inlined_call_operand.vmem [shape: f32[32,64], index: 3, kind: input, shape index: {}]
  %s4 = inlined_call_operand.vmem [shape: f32[32,1], index: 4, kind: input, shape index: {}]
  %s5 = inlined_call_operand.vmem [shape: f32[16,32], index: 5, kind: input, shape index: {}]
  %s6 = inlined_call_operand.vmem [shape: f32[16,1], index: 6, kind: input, shape index: {}]
  %s7 = inlined_call_operand.hbm [shape: f32[16,128], index: 7, kind: output, shape index: {}]
  %s8 = sld [smem:[#allocation0]]
  $region38: #{tpu_custom_call.1} parent=0
    _
  %s10 = ssub.s32 1, %s8
  %s11 = scalar_select 0, %s10, %s8
  $region1: #{tpu_custom_call.1} parent=0
    #allocation2 [shape = 'u8[8192]{0}', space=vmem, size = 0x2000, scoped, tag = 'output window, operand 0, single buffered']
    #allocation3 [shape = 's32[1]{0}', space=sflag, size = 0x4, scoped, tag = 'scoped memory for tpu_custom_call.1']
    %12 = vsyncpa [#allocation3], 0
    // Predicated region
    $region2: #{tpu_custom_call.1} parent=1 // pred_check
      _
    $region3: #{tpu_custom_call.1} parent=1 // pred_check_branch
      %14 = sbr.rel (0) target = $region5
    $region4: #{tpu_custom_call.1} parent=1 // pred_region
      _
    $region5: #{tpu_custom_call.1} parent=1 // pred_fallthru
      _
    // Predicated region
    $region6: #{tpu_custom_call.1} parent=1 // pred_check
      _
    $region7: #{tpu_custom_call.1} parent=1 // pred_check_branch
      %16 = sbr.rel (0) target = $region9
    $region8: #{tpu_custom_call.1} parent=1 // pred_region
      _
    $region9: #{tpu_custom_call.1} parent=1 // pred_fallthru
      _
    // Predicated region
    $region10: #{tpu_custom_call.1} parent=1 // pred_check
      _
    $region11: #{tpu_custom_call.1} parent=1 // pred_check_branch
      %18 = sbr.rel (0) target = $region13
    $region12: #{tpu_custom_call.1} parent=1 // pred_region
      _
    $region13: #{tpu_custom_call.1} parent=1 // pred_fallthru
      _
    // Predicated region
    $region14: #{tpu_custom_call.1} parent=1 // pred_check
      _
    $region15: #{tpu_custom_call.1} parent=1 // pred_check_branch
      %20 = sbr.rel (0) target = $region17
    $region16: #{tpu_custom_call.1} parent=1 // pred_region
      _
    $region17: #{tpu_custom_call.1} parent=1 // pred_fallthru
      _
    // Predicated region
    $region18: #{tpu_custom_call.1} parent=1 // pred_check
      _
    $region19: #{tpu_custom_call.1} parent=1 // pred_check_branch
      %22 = sbr.rel (0) target = $region21
    $region20: #{tpu_custom_call.1} parent=1 // pred_region
      _
    $region21: #{tpu_custom_call.1} parent=1 // pred_fallthru
      _
    // Predicated region
    $region22: #{tpu_custom_call.1} parent=1 // pred_check
      _
    $region23: #{tpu_custom_call.1} parent=1 // pred_check_branch
      %24 = sbr.rel (0) target = $region25
    $region24: #{tpu_custom_call.1} parent=1 // pred_region
      _
    $region25: #{tpu_custom_call.1} parent=1 // pred_fallthru
      _
    // Predicated region
    $region26: #{tpu_custom_call.1} parent=1 // pred_check
      _
    $region27: #{tpu_custom_call.1} parent=1 // pred_check_branch
      %26 = sbr.rel (0) target = $region29
    $region28: #{tpu_custom_call.1} parent=1 // pred_region
      _
    $region29: #{tpu_custom_call.1} parent=1 // pred_fallthru
      _
    %v27 = vld [vmem:[%s1] sm:$0xff]
    %v28 = vld [vmem:[%s1 + $0x8] sm:$0xff]
    %v29 = vld [vmem:[%s1 + $0x10] sm:$0xff]
    %v30 = vld [vmem:[%s1 + $0x18] sm:$0xff]
    %v31 = vld [vmem:[%s1 + $0x20] sm:$0xff]
    %v32 = vld [vmem:[%s1 + $0x28] sm:$0xff]
    %v33 = vld [vmem:[%s1 + $0x30] sm:$0xff]
    %v34 = vld [vmem:[%s1 + $0x38] sm:$0xff]
    %v35 = vld [vmem:[%s0] sm:$0xff]
    %v36 = vld [vmem:[%s0 + $0x8] sm:$0xff]
    %v37 = vld [vmem:[%s0 + $0x10] sm:$0xff]
    %v38 = vld [vmem:[%s0 + $0x18] sm:$0xff]
    %v39 = vld [vmem:[%s2] sm:$0xff]
    %v40 = vld [vmem:[%s2 + $0x8] sm:$0xff]
    %v41 = vld [vmem:[%s2 + $0x10] sm:$0xff]
    %v42 = vld [vmem:[%s2 + $0x18] sm:$0xff]
    %v43 = vld [vmem:[%s2 + $0x20] sm:$0xff]
    %v44 = vld [vmem:[%s2 + $0x28] sm:$0xff]
    %v45 = vld [vmem:[%s2 + $0x30] sm:$0xff]
    %v46 = vld [vmem:[%s2 + $0x38] sm:$0xff]
    %48 = vset.pattern.permute.xlu0 0
    %49 = vperm.xlu0 %48, %v39
    %v50 = vpop.permute.xlu0 %49
    %53 = vset.pattern.permute.xlu0 0
    %54 = vperm.xlu0 %53, %v40
    %v55 = vpop.permute.xlu0 %54
    %58 = vset.pattern.permute.xlu0 0
    %59 = vperm.xlu0 %58, %v41
    %v60 = vpop.permute.xlu0 %59
    %63 = vset.pattern.permute.xlu0 0
    %64 = vperm.xlu0 %63, %v42
    %v65 = vpop.permute.xlu0 %64
    %68 = vset.pattern.permute.xlu0 0
    %69 = vperm.xlu0 %68, %v43
    %v70 = vpop.permute.xlu0 %69
    %73 = vset.pattern.permute.xlu0 0
    %74 = vperm.xlu0 %73, %v44
    %v75 = vpop.permute.xlu0 %74
    %78 = vset.pattern.permute.xlu0 0
    %79 = vperm.xlu0 %78, %v45
    %v80 = vpop.permute.xlu0 %79
    %83 = vset.pattern.permute.xlu0 0
    %84 = vperm.xlu0 %83, %v46
    %v85 = vpop.permute.xlu0 %84
    %vm87 = vcmask 261120
    %v89 = vsel %vm87, %v27, 0
    %v92 = vsel %vm87, %v28, 0
    %v95 = vsel %vm87, %v29, 0
    %v98 = vsel %vm87, %v30, 0
    %v101 = vsel %vm87, %v31, 0
    %v104 = vsel %vm87, %v32, 0
    %v107 = vsel %vm87, %v33, 0
    %v110 = vsel %vm87, %v34, 0
    %112 = vmatprep.subr.mxu0 0.0
    %113 = vmatpush1.msra.mxu0 0.0
    %114 = vmatprep.subr.mxu0 0.0
    %115 = vmatpush1.msra.mxu0 0.0
    %116 = vmatprep.subr.mxu0 0.0
    %117 = vmatpush1.msra.mxu0 0.0
    %118 = vmatprep.subr.mxu0 0.0
    %119 = vmatpush1.msra.mxu0 0.0
    %120 = vmatprep.subr.mxu0 0.0
    %121 = vmatpush1.msra.mxu0 0.0
    %122 = vmatprep.subr.mxu0 0.0
    %123 = vmatpush1.msra.mxu0 0.0
    %124 = vmatprep.subr.mxu0 0.0
    %125 = vmatpush1.msra.mxu0 0.0
    %126 = vmatprep.subr.mxu0 0.0
    %127 = vmatpush1.msra.mxu0 0.0
    %128 = vmatprep.subr.mxu0 0.0
    %129 = vmatpush1.msra.mxu0 0.0
    %130 = vmatprep.subr.mxu0 0.0
    %131 = vmatpush1.msra.mxu0 0.0
    %132 = vmatprep.subr.mxu0 0.0
    %133 = vmatpush1.msra.mxu0 0.0
    %134 = vmatprep.subr.mxu0 0.0
    %135 = vmatpush1.msra.mxu0 0.0
    %136 = vmatprep.subr.mxu0 0.0
    %137 = vmatpush1.msra.mxu0 %v38
    %138 = vmatprep.subr.mxu0 0.0
    %139 = vmatpush1.msra.mxu0 %v37
    %140 = vmatprep.subr.mxu0 0.0
    %141 = vmatpush1.msra.mxu0 %v36
    %142 = vmatprep.subr.mxu0 0.0
    %143 = vmatpush1.msra.mxu0 %v35
    %144 = vmatprep.subr.mxu0 0.0
    %145 = vmatpush2.msra.mxu0 0.0
    %146 = vmatprep.subr.mxu0 0.0
    %147 = vmatpush2.msra.mxu0 0.0
    %148 = vmatprep.subr.mxu0 0.0
    %149 = vmatpush2.msra.mxu0 0.0
    %150 = vmatprep.subr.mxu0 0.0
    %151 = vmatpush2.msra.mxu0 0.0
    %152 = vmatprep.subr.mxu0 0.0
    %153 = vmatpush2.msra.mxu0 0.0
    %154 = vmatprep.subr.mxu0 0.0
    %155 = vmatpush2.msra.mxu0 0.0
    %156 = vmatprep.subr.mxu0 0.0
    %157 = vmatpush2.msra.mxu0 0.0
    %158 = vmatprep.subr.mxu0 0.0
    %159 = vmatpush2.msra.mxu0 0.0
    %160 = vmatprep.subr.mxu0 0.0
    %161 = vmatpush2.msra.mxu0 0.0
    %162 = vmatprep.subr.mxu0 0.0
    %163 = vmatpush2.msra.mxu0 0.0
    %164 = vmatprep.subr.mxu0 0.0
    %165 = vmatpush2.msra.mxu0 0.0
    %166 = vmatprep.subr.mxu0 0.0
    %167 = vmatpush2.msra.mxu0 0.0
    %168 = vmatprep.subr.mxu0 0.0
    %169 = vmatpush2.msra.mxu0 0.0
    %170 = vmatprep.subr.mxu0 0.0
    %171 = vmatpush2.msra.mxu0 0.0
    %172 = vmatprep.subr.mxu0 0.0
    %173 = vmatpush2.msra.mxu0 0.0
    %174 = vmatprep.subr.mxu0 0.0
    %175 = vmatpush2.msra.mxu0 0.0
    %176 = vmatprep.mubr.f32.mxu0 0.0
    %177 = vmatmul.mubr.f32.gmra.mxu0 %v89
    %v178 = vpop.f32.mrf.mxu0
    %v179 = vadd.f32 %v50, %v178
    %v180 = vpop.f32.mrf.mxu0
    %181 = vmatprep.mubr.f32.mxu0 0.0
    %182 = vmatmul.mubr.f32.gmra.mxu0 %v92
    %v183 = vpop.f32.mrf.mxu0
    %v184 = vadd.f32 %v55, %v183
    %v185 = vpop.f32.mrf.mxu0
    %186 = vmatprep.mubr.f32.mxu0 0.0
    %187 = vmatmul.mubr.f32.gmra.mxu0 %v95
    %v188 = vpop.f32.mrf.mxu0
    %v189 = vadd.f32 %v60, %v188
    %v190 = vpop.f32.mrf.mxu0
    %191 = vmatprep.mubr.f32.mxu0 0.0
    %192 = vmatmul.mubr.f32.gmra.mxu0 %v98
    %v193 = vpop.f32.mrf.mxu0
    %v194 = vadd.f32 %v65, %v193
    %v195 = vpop.f32.mrf.mxu0
    %196 = vmatprep.mubr.f32.mxu0 0.0
    %197 = vmatmul.mubr.f32.gmra.mxu0 %v101
    %v198 = vpop.f32.mrf.mxu0
    %v199 = vadd.f32 %v70, %v198
    %v200 = vpop.f32.mrf.mxu0
    %201 = vmatprep.mubr.f32.mxu0 0.0
    %202 = vmatmul.mubr.f32.gmra.mxu0 %v104
    %v203 = vpop.f32.mrf.mxu0
    %v204 = vadd.f32 %v75, %v203
    %v205 = vpop.f32.mrf.mxu0
    %206 = vmatprep.mubr.f32.mxu0 0.0
    %207 = vmatmul.mubr.f32.gmra.mxu0 %v107
    %v208 = vpop.f32.mrf.mxu0
    %v209 = vadd.f32 %v80, %v208
    %v210 = vpop.f32.mrf.mxu0
    %211 = vmatprep.mubr.f32.mxu0 0.0
    %212 = vmatmul.mubr.f32.gmra.mxu0 %v110
    %v213 = vpop.f32.mrf.mxu0
    %v214 = vadd.f32 %v85, %v213
    %v215 = vpop.f32.mrf.mxu0
    %216 = vdwg.mxu0
    %v217 = vmax.f32 %v179, 0.0
    %v218 = vmax.f32 %v184, 0.0
    %v219 = vmax.f32 %v189, 0.0
    %v220 = vmax.f32 %v194, 0.0
    %v221 = vmax.f32 %v199, 0.0
    %v222 = vmax.f32 %v204, 0.0
    %v223 = vmax.f32 %v209, 0.0
    %v224 = vmax.f32 %v214, 0.0
    %v225 = vld [vmem:[%s3] sm:$0xff]
    %v226 = vld [vmem:[%s3 + $0x8] sm:$0xff]
    %v227 = vld [vmem:[%s3 + $0x10] sm:$0xff]
    %v228 = vld [vmem:[%s3 + $0x18] sm:$0xff]
    %v229 = vld [vmem:[%s4] sm:$0xff]
    %v230 = vld [vmem:[%s4 + $0x8] sm:$0xff]
    %v231 = vld [vmem:[%s4 + $0x10] sm:$0xff]
    %v232 = vld [vmem:[%s4 + $0x18] sm:$0xff]
    %234 = vset.pattern.permute.xlu0 0
    %235 = vperm.xlu0 %234, %v229
    %v236 = vpop.permute.xlu0 %235
    %239 = vset.pattern.permute.xlu0 0
    %240 = vperm.xlu0 %239, %v230
    %v241 = vpop.permute.xlu0 %240
    %244 = vset.pattern.permute.xlu0 0
    %245 = vperm.xlu0 %244, %v231
    %v246 = vpop.permute.xlu0 %245
    %249 = vset.pattern.permute.xlu0 0
    %250 = vperm.xlu0 %249, %v232
    %v251 = vpop.permute.xlu0 %250
    %vm253 = vcmask 523264
    %v255 = vsel %vm253, %v225, 0
    %v258 = vsel %vm253, %v226, 0
    %v261 = vsel %vm253, %v227, 0
    %v264 = vsel %vm253, %v228, 0
    %266 = vmatprep.subr.mxu0 0.0
    %267 = vmatpush1.msra.mxu0 0.0
    %268 = vmatprep.subr.mxu0 0.0
    %269 = vmatpush1.msra.mxu0 0.0
    %270 = vmatprep.subr.mxu0 0.0
    %271 = vmatpush1.msra.mxu0 0.0
    %272 = vmatprep.subr.mxu0 0.0
    %273 = vmatpush1.msra.mxu0 0.0
    %274 = vmatprep.subr.mxu0 0.0
    %275 = vmatpush1.msra.mxu0 0.0
    %276 = vmatprep.subr.mxu0 0.0
    %277 = vmatpush1.msra.mxu0 0.0
    %278 = vmatprep.subr.mxu0 0.0
    %279 = vmatpush1.msra.mxu0 0.0
    %280 = vmatprep.subr.mxu0 0.0
    %281 = vmatpush1.msra.mxu0 0.0
    %282 = vmatprep.subr.mxu0 0.0
    %283 = vmatpush1.msra.mxu0 %v224
    %284 = vmatprep.subr.mxu0 0.0
    %285 = vmatpush1.msra.mxu0 %v223
    %286 = vmatprep.subr.mxu0 0.0
    %287 = vmatpush1.msra.mxu0 %v222
    %288 = vmatprep.subr.mxu0 0.0
    %289 = vmatpush1.msra.mxu0 %v221
    %290 = vmatprep.subr.mxu0 0.0
    %291 = vmatpush1.msra.mxu0 %v220
    %292 = vmatprep.subr.mxu0 0.0
    %293 = vmatpush1.msra.mxu0 %v219
    %294 = vmatprep.subr.mxu0 0.0
    %295 = vmatpush1.msra.mxu0 %v218
    %296 = vmatprep.subr.mxu0 0.0
    %297 = vmatpush1.msra.mxu0 %v217
    %298 = vmatprep.subr.mxu0 0.0
    %299 = vmatpush2.msra.mxu0 0.0
    %300 = vmatprep.subr.mxu0 0.0
    %301 = vmatpush2.msra.mxu0 0.0
    %302 = vmatprep.subr.mxu0 0.0
    %303 = vmatpush2.msra.mxu0 0.0
    %304 = vmatprep.subr.mxu0 0.0
    %305 = vmatpush2.msra.mxu0 0.0
    %306 = vmatprep.subr.mxu0 0.0
    %307 = vmatpush2.msra.mxu0 0.0
    %308 = vmatprep.subr.mxu0 0.0
    %309 = vmatpush2.msra.mxu0 0.0
    %310 = vmatprep.subr.mxu0 0.0
    %311 = vmatpush2.msra.mxu0 0.0
    %312 = vmatprep.subr.mxu0 0.0
    %313 = vmatpush2.msra.mxu0 0.0
    %314 = vmatprep.subr.mxu0 0.0
    %315 = vmatpush2.msra.mxu0 0.0
    %316 = vmatprep.subr.mxu0 0.0
    %317 = vmatpush2.msra.mxu0 0.0
    %318 = vmatprep.subr.mxu0 0.0
    %319 = vmatpush2.msra.mxu0 0.0
    %320 = vmatprep.subr.mxu0 0.0
    %321 = vmatpush2.msra.mxu0 0.0
    %322 = vmatprep.subr.mxu0 0.0
    %323 = vmatpush2.msra.mxu0 0.0
    %324 = vmatprep.subr.mxu0 0.0
    %325 = vmatpush2.msra.mxu0 0.0
    %326 = vmatprep.subr.mxu0 0.0
    %327 = vmatpush2.msra.mxu0 0.0
    %328 = vmatprep.subr.mxu0 0.0
    %329 = vmatpush2.msra.mxu0 0.0
    %330 = vmatprep.mubr.f32.mxu0 0.0
    %331 = vmatmul.mubr.f32.gmra.mxu0 %v255
    %v332 = vpop.f32.mrf.mxu0
    %v333 = vadd.f32 %v236, %v332
    %v334 = vpop.f32.mrf.mxu0
    %335 = vmatprep.mubr.f32.mxu0 0.0
    %336 = vmatmul.mubr.f32.gmra.mxu0 %v258
    %v337 = vpop.f32.mrf.mxu0
    %v338 = vadd.f32 %v241, %v337
    %v339 = vpop.f32.mrf.mxu0
    %340 = vmatprep.mubr.f32.mxu0 0.0
    %341 = vmatmul.mubr.f32.gmra.mxu0 %v261
    %v342 = vpop.f32.mrf.mxu0
    %v343 = vadd.f32 %v246, %v342
    %v344 = vpop.f32.mrf.mxu0
    %345 = vmatprep.mubr.f32.mxu0 0.0
    %346 = vmatmul.mubr.f32.gmra.mxu0 %v264
    %v347 = vpop.f32.mrf.mxu0
    %v348 = vadd.f32 %v251, %v347
    %v349 = vpop.f32.mrf.mxu0
    %350 = vdwg.mxu0
    %v351 = vmax.f32 %v333, 0.0
    %v352 = vmax.f32 %v338, 0.0
    %v353 = vmax.f32 %v343, 0.0
    %v354 = vmax.f32 %v348, 0.0
    %v355 = vld [vmem:[%s5] sm:$0xff]
    %v356 = vld [vmem:[%s5 + $0x8] sm:$0xff]
    %v357 = vld [vmem:[%s6] sm:$0xff]
    %v358 = vld [vmem:[%s6 + $0x8] sm:$0xff]
    %360 = vset.pattern.permute.xlu0 0
    %361 = vperm.xlu0 %360, %v357
    %v362 = vpop.permute.xlu0 %361
    %365 = vset.pattern.permute.xlu0 0
    %366 = vperm.xlu0 %365, %v358
    %v367 = vpop.permute.xlu0 %366
    %v370 = vsel %vm87, %v355, 0
    %v373 = vsel %vm87, %v356, 0
    %375 = vmatprep.subr.mxu0 0.0
    %376 = vmatpush1.msra.mxu0 0.0
    %377 = vmatprep.subr.mxu0 0.0
    %378 = vmatpush1.msra.mxu0 0.0
    %379 = vmatprep.subr.mxu0 0.0
    %380 = vmatpush1.msra.mxu0 0.0
    %381 = vmatprep.subr.mxu0 0.0
    %382 = vmatpush1.msra.mxu0 0.0
    %383 = vmatprep.subr.mxu0 0.0
    %384 = vmatpush1.msra.mxu0 0.0
    %385 = vmatprep.subr.mxu0 0.0
    %386 = vmatpush1.msra.mxu0 0.0
    %387 = vmatprep.subr.mxu0 0.0
    %388 = vmatpush1.msra.mxu0 0.0
    %389 = vmatprep.subr.mxu0 0.0
    %390 = vmatpush1.msra.mxu0 0.0
    %391 = vmatprep.subr.mxu0 0.0
    %392 = vmatpush1.msra.mxu0 0.0
    %393 = vmatprep.subr.mxu0 0.0
    %394 = vmatpush1.msra.mxu0 0.0
    %395 = vmatprep.subr.mxu0 0.0
    %396 = vmatpush1.msra.mxu0 0.0
    %397 = vmatprep.subr.mxu0 0.0
    %398 = vmatpush1.msra.mxu0 0.0
    %399 = vmatprep.subr.mxu0 0.0
    %400 = vmatpush1.msra.mxu0 %v354
    %401 = vmatprep.subr.mxu0 0.0
    %402 = vmatpush1.msra.mxu0 %v353
    %403 = vmatprep.subr.mxu0 0.0
    %404 = vmatpush1.msra.mxu0 %v352
    %405 = vmatprep.subr.mxu0 0.0
    %406 = vmatpush1.msra.mxu0 %v351
    %407 = vmatprep.subr.mxu0 0.0
    %408 = vmatpush2.msra.mxu0 0.0
    %409 = vmatprep.subr.mxu0 0.0
    %410 = vmatpush2.msra.mxu0 0.0
    %411 = vmatprep.subr.mxu0 0.0
    %412 = vmatpush2.msra.mxu0 0.0
    %413 = vmatprep.subr.mxu0 0.0
    %414 = vmatpush2.msra.mxu0 0.0
    %415 = vmatprep.subr.mxu0 0.0
    %416 = vmatpush2.msra.mxu0 0.0
    %417 = vmatprep.subr.mxu0 0.0
    %418 = vmatpush2.msra.mxu0 0.0
    %419 = vmatprep.subr.mxu0 0.0
    %420 = vmatpush2.msra.mxu0 0.0
    %421 = vmatprep.subr.mxu0 0.0
    %422 = vmatpush2.msra.mxu0 0.0
    %423 = vmatprep.subr.mxu0 0.0
    %424 = vmatpush2.msra.mxu0 0.0
    %425 = vmatprep.subr.mxu0 0.0
    %426 = vmatpush2.msra.mxu0 0.0
    %427 = vmatprep.subr.mxu0 0.0
    %428 = vmatpush2.msra.mxu0 0.0
    %429 = vmatprep.subr.mxu0 0.0
    %430 = vmatpush2.msra.mxu0 0.0
    %431 = vmatprep.subr.mxu0 0.0
    %432 = vmatpush2.msra.mxu0 0.0
    %433 = vmatprep.subr.mxu0 0.0
    %434 = vmatpush2.msra.mxu0 0.0
    %435 = vmatprep.subr.mxu0 0.0
    %436 = vmatpush2.msra.mxu0 0.0
    %437 = vmatprep.subr.mxu0 0.0
    %438 = vmatpush2.msra.mxu0 0.0
    %439 = vmatprep.mubr.f32.mxu0 0.0
    %440 = vmatmul.mubr.f32.gmra.mxu0 %v370
    %v441 = vpop.f32.mrf.mxu0
    %v442 = vadd.f32 %v362, %v441
    %v443 = vpop.f32.mrf.mxu0
    %444 = vmatprep.mubr.f32.mxu0 0.0
    %445 = vmatmul.mubr.f32.gmra.mxu0 %v373
    %v446 = vpop.f32.mrf.mxu0
    %v447 = vadd.f32 %v367, %v446
    %v448 = vpop.f32.mrf.mxu0
    %449 = vdwg.mxu0
    %450 = vst [vmem:[#allocation2] sm:$0xff] %v442
    %451 = vst [vmem:[#allocation2 + $0x8] sm:$0xff] %v447
    // Predicated region
    $region30: #{tpu_custom_call.1} parent=1 // pred_check
      _
    $region31: #{tpu_custom_call.1} parent=1 // pred_check_branch
      %453 = sbr.rel (0) target = $region33
    $region32: #{tpu_custom_call.1} parent=1 // pred_region
      %s455 = ssub.s32 256, 256
      %456 = vsyncadd [#allocation3], %s455
      %s457 = sshll.u32 [#allocation2], 4
      %s458 = int_to_ptr.vmem [resolvable:$true] %s457
      %463 = dma.vmem_to_hbm [thread:$0]  %s458, 256, %s7, [#allocation3], 128, 128, 8
    $region33: #{tpu_custom_call.1} parent=1 // pred_fallthru
      _
    // Predicated region
    $region34: #{tpu_custom_call.1} parent=1 // pred_check
      _
    $region35: #{tpu_custom_call.1} parent=1 // pred_check_branch
      %465 = sbr.rel (0) target = $region37
    $region36: #{tpu_custom_call.1} parent=1 // pred_region
      %466 = dma.done [#allocation3], 256
    $region37: #{tpu_custom_call.1} parent=1 // pred_fallthru
      _
    %467 = vsyncpa [#allocation3], 1

</llo_original>
